<compile_context>
chip_gen: v6e
topology: v6e:2x2x1
jax: 0.10.0
libtpu: 0.0.40
codegen_flags: <defaults>
</compile_context>

<pallas_src>
import jax
import jax.numpy as jnp
from jax.experimental import pallas as pl
from jax.experimental.pallas import tpu as pltpu


def _round_up(x, m):
    return ((x + m - 1) // m) * m


def _vmem_budget_bytes():
    """Generation-aware per-core VMEM budget for keeping the table resident."""
    try:
        cap = int(pltpu.get_tpu_info().vmem_capacity_bytes)
    except Exception:
        cap = 64 << 20  # conservative: v7x per-TensorCore physical VMEM
    # Leave headroom for Pallas-internal scratch; if the batch axis is split
    # across 2 TensorCores (v7x) each core holds its own table copy.
    return (cap * 5) // 8


# ----------------------------------------------------------------------------
# Fast path: VMEM-resident table + one-hot MXU gather, tile_b labels per step.
# ----------------------------------------------------------------------------
def _onehot_gather_kernel(labels_ref, table_ref, out_ref):
    # labels_ref: (tile_b, 1) int32  (VMEM)
    # table_ref : (C, cond)          (VMEM, constant block -> stays resident)
    # out_ref   : (tile_b, cond)
    tile_b = labels_ref.shape[0]
    num_rows = table_ref.shape[0]
    class_ids = jax.lax.broadcasted_iota(jnp.int32, (tile_b, num_rows), 1)
    onehot = (labels_ref[...] == class_ids).astype(table_ref.dtype)
    out_ref[...] = jnp.dot(
        onehot,
        table_ref[...],
        preferred_element_type=jnp.float32,
        precision=jax.lax.Precision.HIGHEST,
    ).astype(out_ref.dtype)


# ----------------------------------------------------------------------------
# Resident-table path for large num_rows: per-row gather, O(tile_b*cond) work.
# Labels are scalar-prefetched into SMEM (whole padded array).
# ----------------------------------------------------------------------------
def _resident_rowgather_kernel(labels_smem, table_ref, out_ref):
    i = pl.program_id(0)
    rows = out_ref.shape[0]
    base = i * rows

    def body(r, carry):
        lab = labels_smem[base + r]          # clamped in the wrapper
        out_ref[r, :] = table_ref[lab, :]
        return carry

    jax.lax.fori_loop(0, rows, body, 0)


# ----------------------------------------------------------------------------
# Huge-table fallback: table stays in HBM (pl.ANY); 32 data-dependent row DMAs
# per grid step into a VMEM scratch, then one full-tile store.
# ----------------------------------------------------------------------------
def _dma_gather_kernel(labels_smem, table_hbm, out_ref, row_buf, copy_sems):
    i = pl.program_id(0)
    rows = out_ref.shape[0]
    base = i * rows

    def issue(r, carry):
        lab = labels_smem[base + r]          # clamped in the wrapper
        pltpu.make_async_copy(table_hbm.at[lab], row_buf.at[r],
                              copy_sems.at[r]).start()
        return carry

    jax.lax.fori_loop(0, rows, issue, 0)

    def wait(r, carry):
        # Index 0 only provides the shape for the wait descriptor.
        pltpu.make_async_copy(table_hbm.at[0], row_buf.at[r],
                              copy_sems.at[r]).wait()
        return carry

    jax.lax.fori_loop(0, rows, wait, 0)

    out_ref[...] = row_buf[...]


def label_embedder_forward(labels, table):
    """Pallas equivalent of LabelEmbedder.forward.

    labels: int array of any shape.
    table:  (num_classes + 1, cond_size) float array.
    returns: labels.shape + (cond_size,) array of table.dtype.
    """
    orig_shape = labels.shape
    num_rows, cond_size = table.shape
    itemsize = jnp.dtype(table.dtype).itemsize

    flat = labels.reshape(-1).astype(jnp.int32)
    # Safety: never let a bad label drive an out-of-bounds gather/DMA.
    flat = jnp.clip(flat, 0, num_rows - 1)
    b = int(flat.shape[0])

    # Mem-/step-overhead-bound op: use big, sublane-aligned batch tiles
    # (unmasked lane-dense stores, fewer grid steps; 512 fills v6e/v7x MXU,
    # 128+ already fills v5e).  bf16 tables pack 16 rows per sublane vreg.
    sub = 16 if itemsize < 4 else 8
    tile_b = min(512, _round_up(max(b, 1), sub))
    n_tiles = pl.cdiv(b, tile_b)

    budget = _vmem_budget_bytes()

    table_bytes = num_rows * cond_size * itemsize
    out_tile_bytes = tile_b * cond_size * itemsize
    label_tile_bytes = tile_b * 4
    # One-hot path temporaries: int32 iota + one-hot + f32 MXU result.
    onehot_tmp_bytes = 3 * tile_b * num_rows * 4 + tile_b * cond_size * 4
    # Conservative: assume double buffering on every blocked operand.
    common = 2 * table_bytes + 2 * out_tile_bytes + 2 * label_tile_bytes
    need_onehot = common + onehot_tmp_bytes
    need_gather = common

    out_shape = jax.ShapeDtypeStruct((b, cond_size), table.dtype)

    if num_rows <= 4096 and need_onehot <= budget:
        # ---- Fast path: one-hot MXU gather over a VMEM-resident table. ----
        vmem_limit = int(max(need_onehot + (4 << 20), 16 << 20))
        out = pl.pallas_call(
            _onehot_gather_kernel,
            out_shape=out_shape,
            grid=(n_tiles,),
            in_specs=[
                # tile_b labels per grid step (ragged last block is fine: the
                # one-hot compare is safe for arbitrary padded values).
                pl.BlockSpec((tile_b, 1), lambda i: (i, 0)),
                # Whole table, same block every step -> stays VMEM-resident.
                pl.BlockSpec((num_rows, cond_size), lambda i: (0, 0)),
            ],
            out_specs=pl.BlockSpec((tile_b, cond_size), lambda i: (i, 0)),
            compiler_params=pltpu.CompilerParams(
                # Independent output tiles: lets v7x shard batch over 2 TCs.
                # TODO(synk): verify the 2-TC split with the profiler; switch
                # to core-parallel semantics if "parallel" does not split.
                dimension_semantics=("parallel",),
                vmem_limit_bytes=vmem_limit,
            ),
        )(flat.reshape(b, 1), table)

    elif need_gather <= budget:
        # ---- Resident table but too many rows for one-hot: row gather. ----
        b_pad = int(n_tiles) * tile_b
        labels_pad = jnp.pad(flat, (0, b_pad - b))
        vmem_limit = int(max(need_gather + (4 << 20), 16 << 20))
        grid_spec = pltpu.PrefetchScalarGridSpec(
            num_scalar_prefetch=1,
            grid=(n_tiles,),
            in_specs=[pl.BlockSpec((num_rows, cond_size), lambda i, lab: (0, 0))],
            out_specs=pl.BlockSpec((tile_b, cond_size), lambda i, lab: (i, 0)),
        )
        out = pl.pallas_call(
            _resident_rowgather_kernel,
            out_shape=out_shape,
            grid_spec=grid_spec,
            compiler_params=pltpu.CompilerParams(
                dimension_semantics=("parallel",),
                vmem_limit_bytes=vmem_limit,
            ),
        )(labels_pad, table)

    else:
        # ---- Huge-table fallback: batched data-dependent row DMAs. ----
        rows = 32
        n_steps = pl.cdiv(b, rows)
        b_pad = int(n_steps) * rows
        labels_pad = jnp.pad(flat, (0, b_pad - b))
        grid_spec = pltpu.PrefetchScalarGridSpec(
            num_scalar_prefetch=1,
            grid=(n_steps,),
            in_specs=[pl.BlockSpec(memory_space=pl.ANY)],
            out_specs=pl.BlockSpec((rows, cond_size), lambda i, lab: (i, 0)),
            scratch_shapes=[
                pltpu.VMEM((rows, cond_size), table.dtype),
                pltpu.SemaphoreType.DMA((rows,)),
            ],
        )
        out = pl.pallas_call(
            _dma_gather_kernel,
            out_shape=out_shape,
            grid_spec=grid_spec,
            compiler_params=pltpu.CompilerParams(
                dimension_semantics=("arbitrary",),
            ),
        )(labels_pad, table)

    return out.reshape(*orig_shape, cond_size)


def make_label_embedder_params(key, num_classes, cond_size, dtype=jnp.float32):
    # nn.Embedding default init: N(0, 1).
    return jax.random.normal(key, (num_classes + 1, cond_size), dtype=dtype)


if __name__ == "__main__":
    num_classes = 10
    cond_size = 128      # lane-aligned embedding width

    key = jax.random.PRNGKey(0)
    k_table, k1, k2, k3 = jax.random.split(key, 4)

    table = make_label_embedder_params(k_table, num_classes, cond_size)

    # Case 1: simple (B,) labels, may include the "null" class == num_classes.
    labels = jax.random.randint(k1, (8,), 0, num_classes + 1, dtype=jnp.int32)
    out = jax.block_until_ready(label_embedder_forward(labels, table))
    ref = table[labels]
    assert out.shape == (8, cond_size)
    assert jnp.allclose(out, ref, atol=1e-4, rtol=1e-4), "mismatch (1D labels)"

    # Case 2: multi-dim labels, batch not a multiple of the tile (ragged block).
    labels2 = jax.random.randint(k2, (2, 5), 0, num_classes + 1, dtype=jnp.int32)
    out2 = jax.block_until_ready(label_embedder_forward(labels2, table))
    ref2 = table[labels2]
    assert out2.shape == (2, 5, cond_size)
    assert jnp.allclose(out2, ref2, atol=1e-4, rtol=1e-4), "mismatch (2D labels)"

    # Case 3: larger batch -> multi-tile grid with a ragged final tile.
    labels3 = jax.random.randint(k3, (1040,), 0, num_classes + 1, dtype=jnp.int32)
    out3 = jax.block_until_ready(label_embedder_forward(labels3, table))
    ref3 = table[labels3]
    assert out3.shape == (1040, cond_size)
    assert jnp.allclose(out3, ref3, atol=1e-4, rtol=1e-4), "mismatch (big batch)"

    print("KERNEL_OK")
</pallas_src>

<mosaic_0001>
module attributes {stable_mosaic.version = 11 : i64} {
  func.func @_onehot_gather_kernel(%arg0: i32, %arg1: memref<8x1xi32, #tpu.memory_space<vmem>>, %arg2: memref<11x128xf32, #tpu.memory_space<vmem>>, %arg3: memref<8x128xf32, #tpu.memory_space<vmem>>) attributes {dimension_semantics = [#tpu.dimension_semantics<parallel>], iteration_bounds = array<i64: 1>, scalar_prefetch = 0 : i64, scratch_operands = 0 : i64, tpu.core_type = #tpu.core_type<tc>, window_params = [{transform_indices = @transform_0, window_bounds = array<i64: 8, 1>}, {pipeline_mode = #tpu.pipeline_mode<synchronous>, transform_indices = @transform_1, window_bounds = array<i64: 11, 128>}, {transform_indices = @transform_2, window_bounds = array<i64: 8, 128>}]} {
    %0 = tpu.iota {dimensions = array<i32: 1>} : vector<8x11xi32>
    %c0 = arith.constant 0 : index
    %c0_0 = arith.constant 0 : index
    %1 = vector.load %arg1[%c0, %c0_0] : memref<8x1xi32, #tpu.memory_space<vmem>>, vector<8x1xi32>
    %2 = vector.broadcast %1 : vector<8x1xi32> to vector<8x11xi32>
    %3 = arith.cmpi eq, %2, %0 : vector<8x11xi32>
    %4 = arith.extui %3 : vector<8x11xi1> to vector<8x11xi32>
    %5 = arith.sitofp %4 : vector<8x11xi32> to vector<8x11xf32>
    %c0_1 = arith.constant 0 : index
    %c0_2 = arith.constant 0 : index
    %6 = vector.load %arg2[%c0_1, %c0_2] : memref<11x128xf32, #tpu.memory_space<vmem>>, vector<11x128xf32>
    %cst = arith.constant dense<0.000000e+00> : vector<8x128xf32>
    %7 = tpu.matmul %5, %6, %cst {dimension_numbers = #tpu.dot_dimension_numbers<[1], [0], [0], [1], [0, 0, 1, 1], [], []>, precision = #tpu.contract_precision<fp32>} : vector<8x11xf32>, vector<11x128xf32>, vector<8x128xf32> -> vector<8x128xf32>
    %c0_3 = arith.constant 0 : index
    %c0_4 = arith.constant 0 : index
    %8 = vector.load %arg3[%c0_3, %c0_4] : memref<8x128xf32, #tpu.memory_space<vmem>>, vector<8x128xf32>
    tpu.vector_store %arg3[%c0_3, %c0_4], %7 {strides = array<i32>} : memref<8x128xf32, #tpu.memory_space<vmem>>, vector<8x128xf32>,
    return
  }
  func.func @transform_0(%arg0: i32) -> (i32, i32) {
    %c0_i32 = arith.constant 0 : i32
    %c0_i32_0 = arith.constant 0 : i32
    return %arg0, %c0_i32 : i32, i32
  }
  func.func @transform_1(%arg0: i32) -> (i32, i32) {
    %c0_i32 = arith.constant 0 : i32
    %c0_i32_0 = arith.constant 0 : i32
    %c0_i32_1 = arith.constant 0 : i32
    return %c0_i32, %c0_i32_0 : i32, i32
  }
  func.func @transform_2(%arg0: i32) -> (i32, i32) {
    %c0_i32 = arith.constant 0 : i32
    %c0_i32_0 = arith.constant 0 : i32
    return %arg0, %c0_i32 : i32, i32
  }
}

</mosaic_0001>

<llo_original>
// kernel: tpu_custom_call.1
$region0: #{tpu_custom_call.1}
  #allocation0 [shape = 'u32[]', space=smem, size = 0x4, offset = 0x4, fixed_abs, tag = 'smem constant byte address 0x4 - core index']
  #allocation1 [shape = 'u32[144,128]{1,0:T(1,128)}', space=vmem, size = 0x12000, scoped, tag = 'internal scratch']
  %s0 = inlined_call_operand.vmem [shape: s32[8,1], index: 0, kind: input, shape index: {}]
  %s1 = inlined_call_operand.hbm [shape: f32[11,128], index: 1, kind: input, shape index: {}]
  %s2 = inlined_call_operand.hbm [shape: f32[8,128], index: 2, kind: output, shape index: {}]
  %s3 = sld [smem:[#allocation0]]
  $region22: #{tpu_custom_call.1} parent=0
    _
  %s5 = ssub.s32 1, %s3
  %s6 = scalar_select 0, %s5, %s3
  $region1: #{tpu_custom_call.1} parent=0
    #allocation2 [shape = 'u8[8192]{0}', space=vmem, size = 0x2000, scoped, tag = 'input window, operand 1, single buffered']
    #allocation3 [shape = 's32[1]{0}', space=sflag, size = 0x4, scoped, tag = 'scoped memory for tpu_custom_call.1']
    #allocation4 [shape = 's32[1]{0}', space=sflag, size = 0x4, scoped, tag = 'scoped memory for tpu_custom_call.1']
    #allocation5 [shape = 'u8[4096]{0}', space=vmem, size = 0x1000, scoped, tag = 'output window, operand 0, single buffered']
    %7 = vsyncpa [#allocation3], 0
    %8 = vsyncpa [#allocation4], 0
    // Predicated region
    $region2: #{tpu_custom_call.1} parent=1 // pred_check
      _
    $region3: #{tpu_custom_call.1} parent=1 // pred_check_branch
      %10 = sbr.rel (0) target = $region5
    $region4: #{tpu_custom_call.1} parent=1 // pred_region
      _
    $region5: #{tpu_custom_call.1} parent=1 // pred_fallthru
      _
    // Predicated region
    $region6: #{tpu_custom_call.1} parent=1 // pred_check
      _
    $region7: #{tpu_custom_call.1} parent=1 // pred_check_branch
      %12 = sbr.rel (0) target = $region9
    $region8: #{tpu_custom_call.1} parent=1 // pred_region
      %s14 = ssub.s32 256, 256
      %15 = vsyncadd [#allocation3], %s14
      %s16 = sshll.u32 [#allocation2], 4
      %s17 = int_to_ptr.vmem [resolvable:$true] %s16
      %22 = dma.hbm_to_vmem [thread:$0]  %s1, 256, %s17, [#allocation3], 128, 128, 8
    $region9: #{tpu_custom_call.1} parent=1 // pred_fallthru
      _
    // Predicated region
    $region10: #{tpu_custom_call.1} parent=1 // pred_check
      _
    $region11: #{tpu_custom_call.1} parent=1 // pred_check_branch
      %24 = sbr.rel (0) target = $region13
    $region12: #{tpu_custom_call.1} parent=1 // pred_region
      %25 = dma.done [#allocation3], 256
    $region13: #{tpu_custom_call.1} parent=1 // pred_fallthru
      _
    %v26 = vlaneseq
    %v27 = vand.u32 %v26, 127
    %v28 = vld [vmem:[%s0] sm:$0xff]
    %29 = vset.pattern.permute.xlu0 0
    %30 = vperm.xlu0 %29, %v28
    %v31 = vpop.permute.xlu0 %30
    %vm32 = vcmp.eq.s32.totalorder %v31, %v27
    %v33 = vsel %vm32, 1, 0
    %v34 = vcvt.s32.f32 %v33
    %v35 = vld [vmem:[#allocation2] sm:$0xff]
    %v36 = vld [vmem:[#allocation2 + $0x8] sm:$0x7]
    %vm37 = vcmask 89088
    %v39 = vsel %vm37, %v34, 0
    %vm41 = vcmask 1042432
    %v43 = vsel %vm41, %v36, 0
    %45 = vmatprep.subr.mxu0 0.0
    %46 = vmatpush1.msra.mxu0 0.0
    %47 = vmatprep.subr.mxu0 0.0
    %48 = vmatpush1.msra.mxu0 0.0
    %49 = vmatprep.subr.mxu0 0.0
    %50 = vmatpush1.msra.mxu0 0.0
    %51 = vmatprep.subr.mxu0 0.0
    %52 = vmatpush1.msra.mxu0 0.0
    %53 = vmatprep.subr.mxu0 0.0
    %54 = vmatpush1.msra.mxu0 0.0
    %55 = vmatprep.subr.mxu0 0.0
    %56 = vmatpush1.msra.mxu0 0.0
    %57 = vmatprep.subr.mxu0 0.0
    %58 = vmatpush1.msra.mxu0 0.0
    %59 = vmatprep.subr.mxu0 0.0
    %60 = vmatpush1.msra.mxu0 0.0
    %61 = vmatprep.subr.mxu0 0.0
    %62 = vmatpush1.msra.mxu0 0.0
    %63 = vmatprep.subr.mxu0 0.0
    %64 = vmatpush1.msra.mxu0 0.0
    %65 = vmatprep.subr.mxu0 0.0
    %66 = vmatpush1.msra.mxu0 0.0
    %67 = vmatprep.subr.mxu0 0.0
    %68 = vmatpush1.msra.mxu0 0.0
    %69 = vmatprep.subr.mxu0 0.0
    %70 = vmatpush1.msra.mxu0 0.0
    %71 = vmatprep.subr.mxu0 0.0
    %72 = vmatpush1.msra.mxu0 0.0
    %73 = vmatprep.subr.mxu0 0.0
    %v74 = vand.u32 %v43, 4294901760
    %75 = vmatpush1.msra.mxu0 %v74
    %76 = vmatprep.subr.mxu0 0.0
    %v77 = vand.u32 %v35, 4294901760
    %78 = vmatpush1.msra.mxu0 %v77
    %79 = vmatprep.subr.mxu0 0.0
    %80 = vmatpush2.msra.mxu0 0.0
    %81 = vmatprep.subr.mxu0 0.0
    %82 = vmatpush2.msra.mxu0 0.0
    %83 = vmatprep.subr.mxu0 0.0
    %84 = vmatpush2.msra.mxu0 0.0
    %85 = vmatprep.subr.mxu0 0.0
    %86 = vmatpush2.msra.mxu0 0.0
    %87 = vmatprep.subr.mxu0 0.0
    %88 = vmatpush2.msra.mxu0 0.0
    %89 = vmatprep.subr.mxu0 0.0
    %90 = vmatpush2.msra.mxu0 0.0
    %91 = vmatprep.subr.mxu0 0.0
    %92 = vmatpush2.msra.mxu0 0.0
    %93 = vmatprep.subr.mxu0 0.0
    %94 = vmatpush2.msra.mxu0 0.0
    %95 = vmatprep.subr.mxu0 0.0
    %96 = vmatpush2.msra.mxu0 0.0
    %97 = vmatprep.subr.mxu0 0.0
    %98 = vmatpush2.msra.mxu0 0.0
    %99 = vmatprep.subr.mxu0 0.0
    %100 = vmatpush2.msra.mxu0 0.0
    %101 = vmatprep.subr.mxu0 0.0
    %102 = vmatpush2.msra.mxu0 0.0
    %103 = vmatprep.subr.mxu0 0.0
    %104 = vmatpush2.msra.mxu0 0.0
    %105 = vmatprep.subr.mxu0 0.0
    %106 = vmatpush2.msra.mxu0 0.0
    %107 = vmatprep.subr.mxu0 0.0
    %108 = vmatpush2.msra.mxu0 0.0
    %109 = vmatprep.subr.mxu0 0.0
    %110 = vmatpush2.msra.mxu0 0.0
    %111 = vmatprep.mubr.f32.mxu0 0.0
    %v112 = vand.u32 %v39, 4294901760
    %v113 = vsub.f32 %v39, %v112
    %v114 = vand.u32 %v113, 4294901760
    %v115 = vsub.f32 %v113, %v114
    %v116 = vand.u32 %v115, 4294901760
    %117 = vmatmul.mubr.f32.gmra.mxu0 %v116
    %v118 = vpop.f32.mrf.mxu0
    %v119 = vadd.f32 0.0, %v118
    %v120 = vpop.f32.mrf.mxu0
    %121 = vdwg.mxu0
    %122 = vmatprep.subr.mxu0 0.0
    %123 = vmatpush1.msra.mxu0 0.0
    %124 = vmatprep.subr.mxu0 0.0
    %125 = vmatpush1.msra.mxu0 0.0
    %126 = vmatprep.subr.mxu0 0.0
    %127 = vmatpush1.msra.mxu0 0.0
    %128 = vmatprep.subr.mxu0 0.0
    %129 = vmatpush1.msra.mxu0 0.0
    %130 = vmatprep.subr.mxu0 0.0
    %131 = vmatpush1.msra.mxu0 0.0
    %132 = vmatprep.subr.mxu0 0.0
    %133 = vmatpush1.msra.mxu0 0.0
    %134 = vmatprep.subr.mxu0 0.0
    %135 = vmatpush1.msra.mxu0 0.0
    %136 = vmatprep.subr.mxu0 0.0
    %137 = vmatpush1.msra.mxu0 0.0
    %138 = vmatprep.subr.mxu0 0.0
    %139 = vmatpush1.msra.mxu0 0.0
    %140 = vmatprep.subr.mxu0 0.0
    %141 = vmatpush1.msra.mxu0 0.0
    %142 = vmatprep.subr.mxu0 0.0
    %143 = vmatpush1.msra.mxu0 0.0
    %144 = vmatprep.subr.mxu0 0.0
    %145 = vmatpush1.msra.mxu0 0.0
    %146 = vmatprep.subr.mxu0 0.0
    %147 = vmatpush1.msra.mxu0 0.0
    %148 = vmatprep.subr.mxu0 0.0
    %149 = vmatpush1.msra.mxu0 0.0
    %150 = vmatprep.subr.mxu0 0.0
    %v151 = vand.u32 %v43, 4294901760
    %v152 = vsub.f32 %v43, %v151
    %v153 = vand.u32 %v152, 4294901760
    %v154 = vsub.f32 %v152, %v153
    %v155 = vand.u32 %v154, 4294901760
    %156 = vmatpush1.msra.mxu0 %v155
    %157 = vmatprep.subr.mxu0 0.0
    %v158 = vand.u32 %v35, 4294901760
    %v159 = vsub.f32 %v35, %v158
    %v160 = vand.u32 %v159, 4294901760
    %v161 = vsub.f32 %v159, %v160
    %v162 = vand.u32 %v161, 4294901760
    %163 = vmatpush1.msra.mxu0 %v162
    %164 = vmatprep.subr.mxu0 0.0
    %165 = vmatpush2.msra.mxu0 0.0
    %166 = vmatprep.subr.mxu0 0.0
    %167 = vmatpush2.msra.mxu0 0.0
    %168 = vmatprep.subr.mxu0 0.0
    %169 = vmatpush2.msra.mxu0 0.0
    %170 = vmatprep.subr.mxu0 0.0
    %171 = vmatpush2.msra.mxu0 0.0
    %172 = vmatprep.subr.mxu0 0.0
    %173 = vmatpush2.msra.mxu0 0.0
    %174 = vmatprep.subr.mxu0 0.0
    %175 = vmatpush2.msra.mxu0 0.0
    %176 = vmatprep.subr.mxu0 0.0
    %177 = vmatpush2.msra.mxu0 0.0
    %178 = vmatprep.subr.mxu0 0.0
    %179 = vmatpush2.msra.mxu0 0.0
    %180 = vmatprep.subr.mxu0 0.0
    %181 = vmatpush2.msra.mxu0 0.0
    %182 = vmatprep.subr.mxu0 0.0
    %183 = vmatpush2.msra.mxu0 0.0
    %184 = vmatprep.subr.mxu0 0.0
    %185 = vmatpush2.msra.mxu0 0.0
    %186 = vmatprep.subr.mxu0 0.0
    %187 = vmatpush2.msra.mxu0 0.0
    %188 = vmatprep.subr.mxu0 0.0
    %189 = vmatpush2.msra.mxu0 0.0
    %190 = vmatprep.subr.mxu0 0.0
    %191 = vmatpush2.msra.mxu0 0.0
    %192 = vmatprep.subr.mxu0 0.0
    %193 = vmatpush2.msra.mxu0 0.0
    %194 = vmatprep.subr.mxu0 0.0
    %195 = vmatpush2.msra.mxu0 0.0
    %196 = vmatprep.mubr.f32.mxu0 0.0
    %v197 = vand.u32 %v39, 4294901760
    %198 = vmatmul.mubr.f32.gmra.mxu0 %v197
    %v199 = vpop.f32.mrf.mxu0
    %v200 = vadd.f32 %v119, %v199
    %v201 = vpop.f32.mrf.mxu0
    %202 = vdwg.mxu0
    %203 = vmatprep.subr.mxu0 0.0
    %204 = vmatpush1.msra.mxu0 0.0
    %205 = vmatprep.subr.mxu0 0.0
    %206 = vmatpush1.msra.mxu0 0.0
    %207 = vmatprep.subr.mxu0 0.0
    %208 = vmatpush1.msra.mxu0 0.0
    %209 = vmatprep.subr.mxu0 0.0
    %210 = vmatpush1.msra.mxu0 0.0
    %211 = vmatprep.subr.mxu0 0.0
    %212 = vmatpush1.msra.mxu0 0.0
    %213 = vmatprep.subr.mxu0 0.0
    %214 = vmatpush1.msra.mxu0 0.0
    %215 = vmatprep.subr.mxu0 0.0
    %216 = vmatpush1.msra.mxu0 0.0
    %217 = vmatprep.subr.mxu0 0.0
    %218 = vmatpush1.msra.mxu0 0.0
    %219 = vmatprep.subr.mxu0 0.0
    %220 = vmatpush1.msra.mxu0 0.0
    %221 = vmatprep.subr.mxu0 0.0
    %222 = vmatpush1.msra.mxu0 0.0
    %223 = vmatprep.subr.mxu0 0.0
    %224 = vmatpush1.msra.mxu0 0.0
    %225 = vmatprep.subr.mxu0 0.0
    %226 = vmatpush1.msra.mxu0 0.0
    %227 = vmatprep.subr.mxu0 0.0
    %228 = vmatpush1.msra.mxu0 0.0
    %229 = vmatprep.subr.mxu0 0.0
    %230 = vmatpush1.msra.mxu0 0.0
    %231 = vmatprep.subr.mxu0 0.0
    %v232 = vand.u32 %v43, 4294901760
    %v233 = vsub.f32 %v43, %v232
    %234 = vmatpush1.msra.mxu0 %v233
    %235 = vmatprep.subr.mxu0 0.0
    %v236 = vand.u32 %v35, 4294901760
    %v237 = vsub.f32 %v35, %v236
    %238 = vmatpush1.msra.mxu0 %v237
    %239 = vmatprep.subr.mxu0 0.0
    %240 = vmatpush2.msra.mxu0 0.0
    %241 = vmatprep.subr.mxu0 0.0
    %242 = vmatpush2.msra.mxu0 0.0
    %243 = vmatprep.subr.mxu0 0.0
    %244 = vmatpush2.msra.mxu0 0.0
    %245 = vmatprep.subr.mxu0 0.0
    %246 = vmatpush2.msra.mxu0 0.0
    %247 = vmatprep.subr.mxu0 0.0
    %248 = vmatpush2.msra.mxu0 0.0
    %249 = vmatprep.subr.mxu0 0.0
    %250 = vmatpush2.msra.mxu0 0.0
    %251 = vmatprep.subr.mxu0 0.0
    %252 = vmatpush2.msra.mxu0 0.0
    %253 = vmatprep.subr.mxu0 0.0
    %254 = vmatpush2.msra.mxu0 0.0
    %255 = vmatprep.subr.mxu0 0.0
    %256 = vmatpush2.msra.mxu0 0.0
    %257 = vmatprep.subr.mxu0 0.0
    %258 = vmatpush2.msra.mxu0 0.0
    %259 = vmatprep.subr.mxu0 0.0
    %260 = vmatpush2.msra.mxu0 0.0
    %261 = vmatprep.subr.mxu0 0.0
    %262 = vmatpush2.msra.mxu0 0.0
    %263 = vmatprep.subr.mxu0 0.0
    %264 = vmatpush2.msra.mxu0 0.0
    %265 = vmatprep.subr.mxu0 0.0
    %266 = vmatpush2.msra.mxu0 0.0
    %267 = vmatprep.subr.mxu0 0.0
    %268 = vmatpush2.msra.mxu0 0.0
    %269 = vmatprep.subr.mxu0 0.0
    %270 = vmatpush2.msra.mxu0 0.0
    %271 = vmatprep.mubr.f32.mxu0 0.0
    %v272 = vand.u32 %v39, 4294901760
    %v273 = vsub.f32 %v39, %v272
    %274 = vmatmul.mubr.f32.gmra.mxu0 %v273
    %v275 = vpop.f32.mrf.mxu0
    %v276 = vadd.f32 %v200, %v275
    %v277 = vpop.f32.mrf.mxu0
    %278 = vdwg.mxu0
    %279 = vmatprep.subr.mxu0 0.0
    %280 = vmatpush1.msra.mxu0 0.0
    %281 = vmatprep.subr.mxu0 0.0
    %282 = vmatpush1.msra.mxu0 0.0
    %283 = vmatprep.subr.mxu0 0.0
    %284 = vmatpush1.msra.mxu0 0.0
    %285 = vmatprep.subr.mxu0 0.0
    %286 = vmatpush1.msra.mxu0 0.0
    %287 = vmatprep.subr.mxu0 0.0
    %288 = vmatpush1.msra.mxu0 0.0
    %289 = vmatprep.subr.mxu0 0.0
    %290 = vmatpush1.msra.mxu0 0.0
    %291 = vmatprep.subr.mxu0 0.0
    %292 = vmatpush1.msra.mxu0 0.0
    %293 = vmatprep.subr.mxu0 0.0
    %294 = vmatpush1.msra.mxu0 0.0
    %295 = vmatprep.subr.mxu0 0.0
    %296 = vmatpush1.msra.mxu0 0.0
    %297 = vmatprep.subr.mxu0 0.0
    %298 = vmatpush1.msra.mxu0 0.0
    %299 = vmatprep.subr.mxu0 0.0
    %300 = vmatpush1.msra.mxu0 0.0
    %301 = vmatprep.subr.mxu0 0.0
    %302 = vmatpush1.msra.mxu0 0.0
    %303 = vmatprep.subr.mxu0 0.0
    %304 = vmatpush1.msra.mxu0 0.0
    %305 = vmatprep.subr.mxu0 0.0
    %306 = vmatpush1.msra.mxu0 0.0
    %307 = vmatprep.subr.mxu0 0.0
    %v308 = vand.u32 %v43, 4294901760
    %309 = vmatpush1.msra.mxu0 %v308
    %310 = vmatprep.subr.mxu0 0.0
    %v311 = vand.u32 %v35, 4294901760
    %312 = vmatpush1.msra.mxu0 %v311
    %313 = vmatprep.subr.mxu0 0.0
    %314 = vmatpush2.msra.mxu0 0.0
    %315 = vmatprep.subr.mxu0 0.0
    %316 = vmatpush2.msra.mxu0 0.0
    %317 = vmatprep.subr.mxu0 0.0
    %318 = vmatpush2.msra.mxu0 0.0
    %319 = vmatprep.subr.mxu0 0.0
    %320 = vmatpush2.msra.mxu0 0.0
    %321 = vmatprep.subr.mxu0 0.0
    %322 = vmatpush2.msra.mxu0 0.0
    %323 = vmatprep.subr.mxu0 0.0
    %324 = vmatpush2.msra.mxu0 0.0
    %325 = vmatprep.subr.mxu0 0.0
    %326 = vmatpush2.msra.mxu0 0.0
    %327 = vmatprep.subr.mxu0 0.0
    %328 = vmatpush2.msra.mxu0 0.0
    %329 = vmatprep.subr.mxu0 0.0
    %330 = vmatpush2.msra.mxu0 0.0
    %331 = vmatprep.subr.mxu0 0.0
    %332 = vmatpush2.msra.mxu0 0.0
    %333 = vmatprep.subr.mxu0 0.0
    %334 = vmatpush2.msra.mxu0 0.0
    %335 = vmatprep.subr.mxu0 0.0
    %336 = vmatpush2.msra.mxu0 0.0
    %337 = vmatprep.subr.mxu0 0.0
    %338 = vmatpush2.msra.mxu0 0.0
    %339 = vmatprep.subr.mxu0 0.0
    %340 = vmatpush2.msra.mxu0 0.0
    %341 = vmatprep.subr.mxu0 0.0
    %342 = vmatpush2.msra.mxu0 0.0
    %343 = vmatprep.subr.mxu0 0.0
    %344 = vmatpush2.msra.mxu0 0.0
    %345 = vmatprep.mubr.f32.mxu0 0.0
    %v346 = vand.u32 %v39, 4294901760
    %v347 = vsub.f32 %v39, %v346
    %v348 = vand.u32 %v347, 4294901760
    %349 = vmatmul.mubr.f32.gmra.mxu0 %v348
    %v350 = vpop.f32.mrf.mxu0
    %v351 = vadd.f32 %v276, %v350
    %v352 = vpop.f32.mrf.mxu0
    %353 = vdwg.mxu0
    %354 = vmatprep.subr.mxu0 0.0
    %355 = vmatpush1.msra.mxu0 0.0
    %356 = vmatprep.subr.mxu0 0.0
    %357 = vmatpush1.msra.mxu0 0.0
    %358 = vmatprep.subr.mxu0 0.0
    %359 = vmatpush1.msra.mxu0 0.0
    %360 = vmatprep.subr.mxu0 0.0
    %361 = vmatpush1.msra.mxu0 0.0
    %362 = vmatprep.subr.mxu0 0.0
    %363 = vmatpush1.msra.mxu0 0.0
    %364 = vmatprep.subr.mxu0 0.0
    %365 = vmatpush1.msra.mxu0 0.0
    %366 = vmatprep.subr.mxu0 0.0
    %367 = vmatpush1.msra.mxu0 0.0
    %368 = vmatprep.subr.mxu0 0.0
    %369 = vmatpush1.msra.mxu0 0.0
    %370 = vmatprep.subr.mxu0 0.0
    %371 = vmatpush1.msra.mxu0 0.0
    %372 = vmatprep.subr.mxu0 0.0
    %373 = vmatpush1.msra.mxu0 0.0
    %374 = vmatprep.subr.mxu0 0.0
    %375 = vmatpush1.msra.mxu0 0.0
    %376 = vmatprep.subr.mxu0 0.0
    %377 = vmatpush1.msra.mxu0 0.0
    %378 = vmatprep.subr.mxu0 0.0
    %379 = vmatpush1.msra.mxu0 0.0
    %380 = vmatprep.subr.mxu0 0.0
    %381 = vmatpush1.msra.mxu0 0.0
    %382 = vmatprep.subr.mxu0 0.0
    %v383 = vand.u32 %v43, 4294901760
    %v384 = vsub.f32 %v43, %v383
    %v385 = vand.u32 %v384, 4294901760
    %386 = vmatpush1.msra.mxu0 %v385
    %387 = vmatprep.subr.mxu0 0.0
    %v388 = vand.u32 %v35, 4294901760
    %v389 = vsub.f32 %v35, %v388
    %v390 = vand.u32 %v389, 4294901760
    %391 = vmatpush1.msra.mxu0 %v390
    %392 = vmatprep.subr.mxu0 0.0
    %393 = vmatpush2.msra.mxu0 0.0
    %394 = vmatprep.subr.mxu0 0.0
    %395 = vmatpush2.msra.mxu0 0.0
    %396 = vmatprep.subr.mxu0 0.0
    %397 = vmatpush2.msra.mxu0 0.0
    %398 = vmatprep.subr.mxu0 0.0
    %399 = vmatpush2.msra.mxu0 0.0
    %400 = vmatprep.subr.mxu0 0.0
    %401 = vmatpush2.msra.mxu0 0.0
    %402 = vmatprep.subr.mxu0 0.0
    %403 = vmatpush2.msra.mxu0 0.0
    %404 = vmatprep.subr.mxu0 0.0
    %405 = vmatpush2.msra.mxu0 0.0
    %406 = vmatprep.subr.mxu0 0.0
    %407 = vmatpush2.msra.mxu0 0.0
    %408 = vmatprep.subr.mxu0 0.0
    %409 = vmatpush2.msra.mxu0 0.0
    %410 = vmatprep.subr.mxu0 0.0
    %411 = vmatpush2.msra.mxu0 0.0
    %412 = vmatprep.subr.mxu0 0.0
    %413 = vmatpush2.msra.mxu0 0.0
    %414 = vmatprep.subr.mxu0 0.0
    %415 = vmatpush2.msra.mxu0 0.0
    %416 = vmatprep.subr.mxu0 0.0
    %417 = vmatpush2.msra.mxu0 0.0
    %418 = vmatprep.subr.mxu0 0.0
    %419 = vmatpush2.msra.mxu0 0.0
    %420 = vmatprep.subr.mxu0 0.0
    %421 = vmatpush2.msra.mxu0 0.0
    %422 = vmatprep.subr.mxu0 0.0
    %423 = vmatpush2.msra.mxu0 0.0
    %424 = vmatprep.mubr.f32.mxu0 0.0
    %v425 = vand.u32 %v39, 4294901760
    %426 = vmatmul.mubr.f32.gmra.mxu0 %v425
    %v427 = vpop.f32.mrf.mxu0
    %v428 = vadd.f32 %v351, %v427
    %v429 = vpop.f32.mrf.mxu0
    %430 = vdwg.mxu0
    %431 = vmatprep.subr.mxu0 0.0
    %432 = vmatpush1.msra.mxu0 0.0
    %433 = vmatprep.subr.mxu0 0.0
    %434 = vmatpush1.msra.mxu0 0.0
    %435 = vmatprep.subr.mxu0 0.0
    %436 = vmatpush1.msra.mxu0 0.0
    %437 = vmatprep.subr.mxu0 0.0
    %438 = vmatpush1.msra.mxu0 0.0
    %439 = vmatprep.subr.mxu0 0.0
    %440 = vmatpush1.msra.mxu0 0.0
    %441 = vmatprep.subr.mxu0 0.0
    %442 = vmatpush1.msra.mxu0 0.0
    %443 = vmatprep.subr.mxu0 0.0
    %444 = vmatpush1.msra.mxu0 0.0
    %445 = vmatprep.subr.mxu0 0.0
    %446 = vmatpush1.msra.mxu0 0.0
    %447 = vmatprep.subr.mxu0 0.0
    %448 = vmatpush1.msra.mxu0 0.0
    %449 = vmatprep.subr.mxu0 0.0
    %450 = vmatpush1.msra.mxu0 0.0
    %451 = vmatprep.subr.mxu0 0.0
    %452 = vmatpush1.msra.mxu0 0.0
    %453 = vmatprep.subr.mxu0 0.0
    %454 = vmatpush1.msra.mxu0 0.0
    %455 = vmatprep.subr.mxu0 0.0
    %456 = vmatpush1.msra.mxu0 0.0
    %457 = vmatprep.subr.mxu0 0.0
    %458 = vmatpush1.msra.mxu0 0.0
    %459 = vmatprep.subr.mxu0 0.0
    %v460 = vand.u32 %v43, 4294901760
    %461 = vmatpush1.msra.mxu0 %v460
    %462 = vmatprep.subr.mxu0 0.0
    %v463 = vand.u32 %v35, 4294901760
    %464 = vmatpush1.msra.mxu0 %v463
    %465 = vmatprep.subr.mxu0 0.0
    %466 = vmatpush2.msra.mxu0 0.0
    %467 = vmatprep.subr.mxu0 0.0
    %468 = vmatpush2.msra.mxu0 0.0
    %469 = vmatprep.subr.mxu0 0.0
    %470 = vmatpush2.msra.mxu0 0.0
    %471 = vmatprep.subr.mxu0 0.0
    %472 = vmatpush2.msra.mxu0 0.0
    %473 = vmatprep.subr.mxu0 0.0
    %474 = vmatpush2.msra.mxu0 0.0
    %475 = vmatprep.subr.mxu0 0.0
    %476 = vmatpush2.msra.mxu0 0.0
    %477 = vmatprep.subr.mxu0 0.0
    %478 = vmatpush2.msra.mxu0 0.0
    %479 = vmatprep.subr.mxu0 0.0
    %480 = vmatpush2.msra.mxu0 0.0
    %481 = vmatprep.subr.mxu0 0.0
    %482 = vmatpush2.msra.mxu0 0.0
    %483 = vmatprep.subr.mxu0 0.0
    %484 = vmatpush2.msra.mxu0 0.0
    %485 = vmatprep.subr.mxu0 0.0
    %486 = vmatpush2.msra.mxu0 0.0
    %487 = vmatprep.subr.mxu0 0.0
    %488 = vmatpush2.msra.mxu0 0.0
    %489 = vmatprep.subr.mxu0 0.0
    %490 = vmatpush2.msra.mxu0 0.0
    %491 = vmatprep.subr.mxu0 0.0
    %492 = vmatpush2.msra.mxu0 0.0
    %493 = vmatprep.subr.mxu0 0.0
    %494 = vmatpush2.msra.mxu0 0.0
    %495 = vmatprep.subr.mxu0 0.0
    %496 = vmatpush2.msra.mxu0 0.0
    %497 = vmatprep.mubr.f32.mxu0 0.0
    %v498 = vand.u32 %v39, 4294901760
    %499 = vmatmul.mubr.f32.gmra.mxu0 %v498
    %v500 = vpop.f32.mrf.mxu0
    %v501 = vadd.f32 %v428, %v500
    %v502 = vpop.f32.mrf.mxu0
    %503 = vdwg.mxu0
    %504 = vst [vmem:[#allocation5] sm:$0xff] %v501
    // Predicated region
    $region14: #{tpu_custom_call.1} parent=1 // pred_check
      _
    $region15: #{tpu_custom_call.1} parent=1 // pred_check_branch
      %506 = sbr.rel (0) target = $region17
    $region16: #{tpu_custom_call.1} parent=1 // pred_region
      %s508 = ssub.s32 128, 128
      %509 = vsyncadd [#allocation4], %s508
      %s511 = sshll.u32 [#allocation5], 4
      %s512 = int_to_ptr.vmem [resolvable:$true] %s511
      %514 = dma.vmem_to_hbm [thread:$0]  %s512, 128, %s2, [#allocation4]
    $region17: #{tpu_custom_call.1} parent=1 // pred_fallthru
      _
    // Predicated region
    $region18: #{tpu_custom_call.1} parent=1 // pred_check
      _
    $region19: #{tpu_custom_call.1} parent=1 // pred_check_branch
      %516 = sbr.rel (0) target = $region21
    $region20: #{tpu_custom_call.1} parent=1 // pred_region
      %517 = dma.done [#allocation4], 128
    $region21: #{tpu_custom_call.1} parent=1 // pred_fallthru
      _
    %518 = vsyncpa [#allocation3], 1
    %519 = vsyncpa [#allocation4], 1

</llo_original>
